<compile_context>
chip_gen: v5e
topology: v5e:2x2
jax: 0.10.0
libtpu: 0.0.40
codegen_flags: <defaults>
</compile_context>

<pallas_src>
import functools

import jax
import jax.numpy as jnp
from jax.experimental import pallas as pl
from jax.experimental.pallas import tpu as pltpu

BN_EPS = 1e-5
LANE = 128


def _ceil_to(n: int, m: int) -> int:
    return ((n + m - 1) // m) * m


def _pad_to(a, axis: int, target: int):
    pad = target - a.shape[axis]
    if pad == 0:
        return a
    widths = [(0, 0)] * a.ndim
    widths[axis] = (0, pad)
    return jnp.pad(a, widths)


def _mlp_kernel(x_ref, w1_ref, gamma_ref, beta_ref, w2_ref, b2_ref, o_ref, acc_ref):
    # Grid = (Dout tiles, H tiles); H (axis 1) is the reduction axis for Linear-2.
    h_idx = pl.program_id(1)

    @pl.when(h_idx == 0)
    def _init():
        acc_ref[...] = jnp.zeros_like(acc_ref)

    # ---- Linear-1 for this H tile: (B, Din) @ (Din, tH), bf16 in / f32 acc.
    # b1 is intentionally omitted: BN's batch-mean subtraction cancels it exactly.
    h = jnp.dot(x_ref[...], w1_ref[...], preferred_element_type=jnp.float32)  # (B, tH) f32

    # ---- BatchNorm1d (training mode), single-pass sum / sum-of-squares stats.
    inv_b = 1.0 / h.shape[0]
    s = jnp.sum(h, axis=0, keepdims=True)           # (1, tH)
    ss = jnp.sum(h * h, axis=0, keepdims=True)      # (1, tH)
    mean = s * inv_b
    var = jnp.maximum(ss * inv_b - mean * mean, 0.0)        # biased variance
    scale = jax.lax.rsqrt(var + BN_EPS) * gamma_ref[...]    # fused BN affine
    shift = beta_ref[...] - mean * scale

    # ---- BN + ReLU: one mul + one add + one max per element.
    hr = jnp.maximum(h * scale + shift, 0.0)

    # ---- Linear-2 partial product for this H tile, accumulated in f32.
    acc_ref[...] += jnp.dot(hr.astype(jnp.bfloat16), w2_ref[...],
                            preferred_element_type=jnp.float32)

    @pl.when(h_idx == pl.num_programs(1) - 1)
    def _finalize():
        o_ref[...] = (acc_ref[...] + b2_ref[...]).astype(o_ref.dtype)


@functools.partial(jax.jit, static_argnames=("th", "tn"))
def mlp_forward(x, w1, b1, gamma, beta, w2, b2, *, th: int = 128, tn: int = 128):
    """x: (B, Din) f32. Returns (B, Dout) f32.

    b1 is accepted for API parity with the PyTorch module but is not used: it is
    mathematically cancelled by training-mode BatchNorm (mean subtraction).
    """
    del b1  # cancelled exactly by BN batch-mean subtraction
    B, Din = x.shape
    H = w1.shape[1]
    Dout = w2.shape[1]

    # Pad feature dims to full 128-lane vregs (exact: zero padding contributes 0).
    din_p = _ceil_to(Din, LANE)
    h_p = _ceil_to(H, LANE)
    dout_p = _ceil_to(Dout, LANE)
    th = min(th, h_p)
    tn = min(tn, dout_p)

    x_p = _pad_to(x, 1, din_p).astype(jnp.bfloat16)                      # (B, Din_p)
    w1_p = _pad_to(_pad_to(w1, 0, din_p), 1, h_p).astype(jnp.bfloat16)   # (Din_p, H_p)
    gamma_p = _pad_to(gamma, 0, h_p).reshape(1, h_p).astype(jnp.float32)
    beta_p = _pad_to(beta, 0, h_p).reshape(1, h_p).astype(jnp.float32)
    w2_p = _pad_to(_pad_to(w2, 0, h_p), 1, dout_p).astype(jnp.bfloat16)  # (H_p, Dout_p)
    b2_p = _pad_to(b2, 0, dout_p).reshape(1, dout_p).astype(jnp.float32)

    grid = (dout_p // tn, h_p // th)

    cost = pl.CostEstimate(
        flops=2 * B * (din_p * h_p + h_p * dout_p),
        transcendentals=h_p,  # one rsqrt per hidden feature
        bytes_accessed=(x_p.size * 2 + w1_p.size * 2 + w2_p.size * 2
                        + (gamma_p.size + beta_p.size + b2_p.size) * 4
                        + B * dout_p * 4),
    )

    out_p = pl.pallas_call(
        _mlp_kernel,
        out_shape=jax.ShapeDtypeStruct((B, dout_p), jnp.float32),
        grid=grid,
        in_specs=[
            pl.BlockSpec((B, din_p), lambda n, h: (0, 0)),   # x: full batch, full Din
            pl.BlockSpec((din_p, th), lambda n, h: (0, h)),  # w1 tile
            pl.BlockSpec((1, th), lambda n, h: (0, h)),      # gamma tile
            pl.BlockSpec((1, th), lambda n, h: (0, h)),      # beta tile
            pl.BlockSpec((th, tn), lambda n, h: (h, n)),     # w2 tile
            pl.BlockSpec((1, tn), lambda n, h: (0, n)),      # b2 tile
        ],
        out_specs=pl.BlockSpec((B, tn), lambda n, h: (0, n)),  # resident across h axis
        scratch_shapes=[pltpu.VMEM((B, tn), jnp.float32)],
        compiler_params=pltpu.CompilerParams(
            dimension_semantics=("parallel", "arbitrary"),
        ),
        cost_estimate=cost,
    )(x_p, w1_p, gamma_p, beta_p, w2_p, b2_p)

    return out_p[:, :Dout]


def init_params(key, input_size, hidden_size, output_size):
    """Mirror PyTorch nn.Linear defaults (U(-1/sqrt(fan_in), 1/sqrt(fan_in)))
    and nn.BatchNorm1d defaults (gamma=1, beta=0)."""
    k1, k2, k3, k4 = jax.random.split(key, 4)
    bound1 = 1.0 / jnp.sqrt(input_size)
    w1 = jax.random.uniform(k1, (input_size, hidden_size), jnp.float32, -bound1, bound1)
    b1 = jax.random.uniform(k2, (hidden_size,), jnp.float32, -bound1, bound1)
    gamma = jnp.ones((hidden_size,), jnp.float32)
    beta = jnp.zeros((hidden_size,), jnp.float32)
    bound2 = 1.0 / jnp.sqrt(hidden_size)
    w2 = jax.random.uniform(k3, (hidden_size, output_size), jnp.float32, -bound2, bound2)
    b2 = jax.random.uniform(k4, (output_size,), jnp.float32, -bound2, bound2)
    return w1, b1, gamma, beta, w2, b2


def mlp_reference(x, w1, b1, gamma, beta, w2, b2):
    """Pure-JAX f32 reference of the PyTorch forward (training-mode BN),
    including b1 — demonstrates that dropping b1 in the kernel is exact."""
    h = x @ w1 + b1
    mean = h.mean(axis=0)
    var = ((h - mean) ** 2).mean(axis=0)  # biased variance
    hn = (h - mean) / jnp.sqrt(var + BN_EPS) * gamma + beta
    hr = jnp.maximum(hn, 0.0)
    return hr @ w2 + b2


if __name__ == "__main__":
    # NOTE: B must be >= 2 for meaningful training-mode BatchNorm statistics
    # (matches PyTorch semantics).
    B, INPUT, HIDDEN, OUTPUT = 8, 32, 64, 16

    key = jax.random.PRNGKey(0)
    kx, kp = jax.random.split(key)
    x = jax.random.normal(kx, (B, INPUT), jnp.float32)
    params = init_params(kp, INPUT, HIDDEN, OUTPUT)

    out = mlp_forward(x, *params)
    out = jax.block_until_ready(out)

    ref = mlp_reference(x, *params)
    assert out.shape == (B, OUTPUT)
    # bf16 matmul inputs with f32 accumulation -> tolerance loosened accordingly.
    max_err = float(jnp.max(jnp.abs(out - ref)))
    assert jnp.allclose(out, ref, atol=5e-2, rtol=5e-2), (
        f"mismatch vs reference (max abs err {max_err})")

    print("KERNEL_OK")
</pallas_src>

<mosaic_0001>
module attributes {stable_mosaic.version = 11 : i64} {
  func.func @_mlp_kernel(%arg0: i32, %arg1: i32, %arg2: memref<8x128xbf16, #tpu.memory_space<vmem>>, %arg3: memref<128x128xbf16, #tpu.memory_space<vmem>>, %arg4: memref<1x128xf32, #tpu.memory_space<vmem>>, %arg5: memref<1x128xf32, #tpu.memory_space<vmem>>, %arg6: memref<128x128xbf16, #tpu.memory_space<vmem>>, %arg7: memref<1x128xf32, #tpu.memory_space<vmem>>, %arg8: memref<8x128xf32, #tpu.memory_space<vmem>>, %arg9: memref<8x128xf32, #tpu.memory_space<vmem>>) attributes {dimension_semantics = [#tpu.dimension_semantics<parallel>, #tpu.dimension_semantics<arbitrary>], iteration_bounds = array<i64: 1, 1>, scalar_prefetch = 0 : i64, scratch_operands = 1 : i64, tpu.core_type = #tpu.core_type<tc>, window_params = [{pipeline_mode = #tpu.pipeline_mode<synchronous>, transform_indices = @transform_0, window_bounds = array<i64: 8, 128>}, {transform_indices = @transform_1, window_bounds = array<i64: 128, 128>}, {transform_indices = @transform_2, window_bounds = array<i64: 1, 128>}, {transform_indices = @transform_3, window_bounds = array<i64: 1, 128>}, {transform_indices = @transform_4, window_bounds = array<i64: 128, 128>}, {transform_indices = @transform_5, window_bounds = array<i64: 1, 128>}, {transform_indices = @transform_6, window_bounds = array<i64: 8, 128>}]} {
    %c0_i32 = arith.constant 0 : i32
    %0 = arith.cmpi eq, %arg1, %c0_i32 : i32
    %1 = arith.extui %0 : i1 to i32
    %c0_i32_0 = arith.constant 0 : i32
    %2 = arith.cmpi ne, %1, %c0_i32_0 : i32
    scf.if %2 {
      %cst_24 = arith.constant 0.000000e+00 : f32
      %42 = vector.broadcast %cst_24 : f32 to vector<8x128xf32>
      %c0_25 = arith.constant 0 : index
      %c0_26 = arith.constant 0 : index
      %43 = vector.load %arg9[%c0_25, %c0_26] : memref<8x128xf32, #tpu.memory_space<vmem>>, vector<8x128xf32>
      tpu.vector_store %arg9[%c0_25, %c0_26], %42 {strides = array<i32>} : memref<8x128xf32, #tpu.memory_space<vmem>>, vector<8x128xf32>,
    } else {
    }
    %c0 = arith.constant 0 : index
    %c0_1 = arith.constant 0 : index
    %3 = vector.load %arg2[%c0, %c0_1] : memref<8x128xbf16, #tpu.memory_space<vmem>>, vector<8x128xbf16>
    %c0_2 = arith.constant 0 : index
    %c0_3 = arith.constant 0 : index
    %4 = vector.load %arg3[%c0_2, %c0_3] : memref<128x128xbf16, #tpu.memory_space<vmem>>, vector<128x128xbf16>
    %cst = arith.constant dense<0.000000e+00> : vector<8x128xf32>
    %5 = tpu.matmul %3, %4, %cst {dimension_numbers = #tpu.dot_dimension_numbers<[1], [0], [0], [1], [0, 0, 1, 1], [], []>} : vector<8x128xbf16>, vector<128x128xbf16>, vector<8x128xf32> -> vector<8x128xf32>
    %cst_4 = arith.constant dense<0.000000e+00> : vector<128xf32>
    %6 = vector.multi_reduction <add>, %5, %cst_4 [0] : vector<8x128xf32> to vector<128xf32>
    %7 = vector.shape_cast %6 : vector<128xf32> to vector<1x128xf32>
    %8 = arith.mulf %5, %5 : vector<8x128xf32>
    %cst_5 = arith.constant dense<0.000000e+00> : vector<128xf32>
    %9 = vector.multi_reduction <add>, %8, %cst_5 [0] : vector<8x128xf32> to vector<128xf32>
    %10 = vector.shape_cast %9 : vector<128xf32> to vector<1x128xf32>
    %cst_6 = arith.constant 1.250000e-01 : f32
    %11 = vector.broadcast %cst_6 : f32 to vector<1x128xf32>
    %12 = arith.mulf %7, %11 : vector<1x128xf32>
    %cst_7 = arith.constant 1.250000e-01 : f32
    %13 = vector.broadcast %cst_7 : f32 to vector<1x128xf32>
    %14 = arith.mulf %10, %13 : vector<1x128xf32>
    %15 = arith.mulf %12, %12 : vector<1x128xf32>
    %16 = arith.subf %14, %15 : vector<1x128xf32>
    %cst_8 = arith.constant 0.000000e+00 : f32
    %17 = vector.broadcast %cst_8 : f32 to vector<1x128xf32>
    %18 = arith.maximumf %16, %17 : vector<1x128xf32>
    %cst_9 = arith.constant 9.99999974E-6 : f32
    %19 = vector.broadcast %cst_9 : f32 to vector<1x128xf32>
    %20 = arith.addf %18, %19 : vector<1x128xf32>
    %21 = math.rsqrt %20 : vector<1x128xf32>
    %c0_10 = arith.constant 0 : index
    %c0_11 = arith.constant 0 : index
    %22 = vector.load %arg4[%c0_10, %c0_11] : memref<1x128xf32, #tpu.memory_space<vmem>>, vector<1x128xf32>
    %23 = arith.mulf %21, %22 : vector<1x128xf32>
    %c0_12 = arith.constant 0 : index
    %c0_13 = arith.constant 0 : index
    %24 = vector.load %arg5[%c0_12, %c0_13] : memref<1x128xf32, #tpu.memory_space<vmem>>, vector<1x128xf32>
    %25 = arith.mulf %12, %23 : vector<1x128xf32>
    %26 = arith.subf %24, %25 : vector<1x128xf32>
    %27 = vector.broadcast %23 : vector<1x128xf32> to vector<8x128xf32>
    %28 = arith.mulf %5, %27 : vector<8x128xf32>
    %29 = vector.broadcast %26 : vector<1x128xf32> to vector<8x128xf32>
    %30 = arith.addf %28, %29 : vector<8x128xf32>
    %cst_14 = arith.constant 0.000000e+00 : f32
    %31 = vector.broadcast %cst_14 : f32 to vector<8x128xf32>
    %32 = arith.maximumf %30, %31 : vector<8x128xf32>
    %c0_15 = arith.constant 0 : index
    %c0_16 = arith.constant 0 : index
    %33 = vector.load %arg9[%c0_15, %c0_16] : memref<8x128xf32, #tpu.memory_space<vmem>>, vector<8x128xf32>
    %34 = arith.truncf %32 : vector<8x128xf32> to vector<8x128xbf16>
    %c0_17 = arith.constant 0 : index
    %c0_18 = arith.constant 0 : index
    %35 = vector.load %arg6[%c0_17, %c0_18] : memref<128x128xbf16, #tpu.memory_space<vmem>>, vector<128x128xbf16>
    %cst_19 = arith.constant dense<0.000000e+00> : vector<8x128xf32>
    %36 = tpu.matmul %34, %35, %cst_19 {dimension_numbers = #tpu.dot_dimension_numbers<[1], [0], [0], [1], [0, 0, 1, 1], [], []>} : vector<8x128xbf16>, vector<128x128xbf16>, vector<8x128xf32> -> vector<8x128xf32>
    %37 = arith.addf %33, %36 : vector<8x128xf32>
    %c0_20 = arith.constant 0 : index
    %c0_21 = arith.constant 0 : index
    %38 = vector.load %arg9[%c0_20, %c0_21] : memref<8x128xf32, #tpu.memory_space<vmem>>, vector<8x128xf32>
    tpu.vector_store %arg9[%c0_20, %c0_21], %37 {strides = array<i32>} : memref<8x128xf32, #tpu.memory_space<vmem>>, vector<8x128xf32>,
    %c0_i32_22 = arith.constant 0 : i32
    %39 = arith.cmpi eq, %arg1, %c0_i32_22 : i32
    %40 = arith.extui %39 : i1 to i32
    %c0_i32_23 = arith.constant 0 : i32
    %41 = arith.cmpi ne, %40, %c0_i32_23 : i32
    scf.if %41 {
      %c0_24 = arith.constant 0 : index
      %c0_25 = arith.constant 0 : index
      %42 = vector.load %arg9[%c0_24, %c0_25] : memref<8x128xf32, #tpu.memory_space<vmem>>, vector<8x128xf32>
      %c0_26 = arith.constant 0 : index
      %c0_27 = arith.constant 0 : index
      %43 = vector.load %arg7[%c0_26, %c0_27] : memref<1x128xf32, #tpu.memory_space<vmem>>, vector<1x128xf32>
      %44 = vector.broadcast %43 : vector<1x128xf32> to vector<8x128xf32>
      %45 = arith.addf %42, %44 : vector<8x128xf32>
      %c0_28 = arith.constant 0 : index
      %c0_29 = arith.constant 0 : index
      %46 = vector.load %arg8[%c0_28, %c0_29] : memref<8x128xf32, #tpu.memory_space<vmem>>, vector<8x128xf32>
      tpu.vector_store %arg8[%c0_28, %c0_29], %45 {strides = array<i32>} : memref<8x128xf32, #tpu.memory_space<vmem>>, vector<8x128xf32>,
    } else {
    }
    return
  }
  func.func @transform_0(%arg0: i32, %arg1: i32) -> (i32, i32) {
    %c0_i32 = arith.constant 0 : i32
    %c0_i32_0 = arith.constant 0 : i32
    %c0_i32_1 = arith.constant 0 : i32
    return %c0_i32, %c0_i32_0 : i32, i32
  }
  func.func @transform_1(%arg0: i32, %arg1: i32) -> (i32, i32) {
    %c0_i32 = arith.constant 0 : i32
    %c0_i32_0 = arith.constant 0 : i32
    return %c0_i32, %arg1 : i32, i32
  }
  func.func @transform_2(%arg0: i32, %arg1: i32) -> (i32, i32) {
    %c0_i32 = arith.constant 0 : i32
    %c0_i32_0 = arith.constant 0 : i32
    return %c0_i32, %arg1 : i32, i32
  }
  func.func @transform_3(%arg0: i32, %arg1: i32) -> (i32, i32) {
    %c0_i32 = arith.constant 0 : i32
    %c0_i32_0 = arith.constant 0 : i32
    return %c0_i32, %arg1 : i32, i32
  }
  func.func @transform_4(%arg0: i32, %arg1: i32) -> (i32, i32) {
    %c0_i32 = arith.constant 0 : i32
    return %arg1, %arg0 : i32, i32
  }
  func.func @transform_5(%arg0: i32, %arg1: i32) -> (i32, i32) {
    %c0_i32 = arith.constant 0 : i32
    %c0_i32_0 = arith.constant 0 : i32
    return %c0_i32, %arg0 : i32, i32
  }
  func.func @transform_6(%arg0: i32, %arg1: i32) -> (i32, i32) {
    %c0_i32 = arith.constant 0 : i32
    %c0_i32_0 = arith.constant 0 : i32
    return %c0_i32, %arg0 : i32, i32
  }
}

</mosaic_0001>

<llo_original>
// kernel: mlp_forward.1
$region0: #{mlp_forward.1}
  #allocation0 [shape = 'u32[]', space=smem, size = 0x4, offset = 0x4, fixed_abs, tag = 'smem constant byte address 0x4 - core index']
  #allocation1 [shape = 'u32[72,128]{1,0:T(1,128)}', space=vmem, size = 0x9000, scoped, tag = 'internal scratch']
  #allocation2 [shape = 'f32[8,128]{1,0:T(8,128)}', space=vmem, size = 0x1000, scoped, tag = 'scratch operand']
  %s0 = inlined_call_operand.vmem [shape: bf16[8,128], index: 0, kind: input, shape index: {}]
  %s1 = inlined_call_operand.vmem [shape: bf16[128,128], index: 1, kind: input, shape index: {}]
  %s2 = inlined_call_operand.vmem [shape: f32[1,128], index: 2, kind: input, shape index: {}]
  %s3 = inlined_call_operand.vmem [shape: f32[1,128], index: 3, kind: input, shape index: {}]
  %s4 = inlined_call_operand.vmem [shape: bf16[128,128], index: 4, kind: input, shape index: {}]
  %s5 = inlined_call_operand.vmem [shape: f32[1,128], index: 5, kind: input, shape index: {}]
  %s6 = inlined_call_operand.hbm [shape: f32[8,128], index: 6, kind: output, shape index: {}]
  %s7 = sld [smem:[#allocation0]]
  $region42: #{mlp_forward.1} parent=0
    _
  %s9 = ssub.s32 1, %s7
  %s10 = scalar_select 0, %s9, %s7
  $region1: #{mlp_forward.1} parent=0
    #allocation3 [shape = 'u8[4096]{0}', space=vmem, size = 0x1000, scoped, tag = 'output window, operand 0, single buffered']
    #allocation4 [shape = 's32[1]{0}', space=sflag, size = 0x4, scoped, tag = 'scoped memory for mlp_forward.1']
    %11 = vsyncpa [#allocation4], 0
    // Predicated region
    $region2: #{mlp_forward.1} parent=1 // pred_check
      _
    $region3: #{mlp_forward.1} parent=1 // pred_check_branch
      %13 = sbr.rel (0) target = $region5
    $region4: #{mlp_forward.1} parent=1 // pred_region
      _
    $region5: #{mlp_forward.1} parent=1 // pred_fallthru
      _
    // Predicated region
    $region6: #{mlp_forward.1} parent=1 // pred_check
      _
    $region7: #{mlp_forward.1} parent=1 // pred_check_branch
      %15 = sbr.rel (0) target = $region9
    $region8: #{mlp_forward.1} parent=1 // pred_region
      _
    $region9: #{mlp_forward.1} parent=1 // pred_fallthru
      _
    // Predicated region
    $region10: #{mlp_forward.1} parent=1 // pred_check
      _
    $region11: #{mlp_forward.1} parent=1 // pred_check_branch
      %17 = sbr.rel (0) target = $region13
    $region12: #{mlp_forward.1} parent=1 // pred_region
      _
    $region13: #{mlp_forward.1} parent=1 // pred_fallthru
      _
    // Predicated region
    $region14: #{mlp_forward.1} parent=1 // pred_check
      _
    $region15: #{mlp_forward.1} parent=1 // pred_check_branch
      %19 = sbr.rel (0) target = $region17
    $region16: #{mlp_forward.1} parent=1 // pred_region
      _
    $region17: #{mlp_forward.1} parent=1 // pred_fallthru
      _
    // Predicated region
    $region18: #{mlp_forward.1} parent=1 // pred_check
      _
    $region19: #{mlp_forward.1} parent=1 // pred_check_branch
      %21 = sbr.rel (0) target = $region21
    $region20: #{mlp_forward.1} parent=1 // pred_region
      _
    $region21: #{mlp_forward.1} parent=1 // pred_fallthru
      _
    // Predicated region
    $region22: #{mlp_forward.1} parent=1 // pred_check
      _
    $region23: #{mlp_forward.1} parent=1 // pred_check_branch
      %23 = sbr.rel (0) target = $region25
    $region24: #{mlp_forward.1} parent=1 // pred_region
      _
    $region25: #{mlp_forward.1} parent=1 // pred_fallthru
      _
    %p24 = scmp.eq.s32.totalorder 0, 0
    // Predicated region
    $region26: #{mlp_forward.1} parent=1 // pred_check
      %p25 = pneg %p24
    $region27: #{mlp_forward.1} parent=1 // pred_check_branch
      %27 = sbr.rel (%p25) target = $region29
    $region28: #{mlp_forward.1} parent=1 // pred_region
      %28 = vst [vmem:[#allocation2] sm:$0xff] 0.0
    $region29: #{mlp_forward.1} parent=1 // pred_fallthru
      _
    %v29 = vld [vmem:[%s0] sm:$0xf]
    %v30 = vld [vmem:[%s1] sm:$0xf]
    %v31 = vld [vmem:[%s1 + $0x4] sm:$0xf]
    %v32 = vld [vmem:[%s1 + $0x8] sm:$0xf]
    %v33 = vld [vmem:[%s1 + $0xc] sm:$0xf]
    %v34 = vld [vmem:[%s1 + $0x10] sm:$0xf]
    %v35 = vld [vmem:[%s1 + $0x14] sm:$0xf]
    %v36 = vld [vmem:[%s1 + $0x18] sm:$0xf]
    %v37 = vld [vmem:[%s1 + $0x1c] sm:$0xf]
    %v38 = vld [vmem:[%s1 + $0x20] sm:$0xf]
    %v39 = vld [vmem:[%s1 + $0x24] sm:$0xf]
    %v40 = vld [vmem:[%s1 + $0x28] sm:$0xf]
    %v41 = vld [vmem:[%s1 + $0x2c] sm:$0xf]
    %v42 = vld [vmem:[%s1 + $0x30] sm:$0xf]
    %v43 = vld [vmem:[%s1 + $0x34] sm:$0xf]
    %v44 = vld [vmem:[%s1 + $0x38] sm:$0xf]
    %v45 = vld [vmem:[%s1 + $0x3c] sm:$0xf]
    %v62 = vunpack.c.l.b16 %v30
    %v63 = vunpack.c.l.b16 %v31
    %v64 = vunpack.c.l.b16 %v32
    %v65 = vunpack.c.l.b16 %v33
    %v66 = vunpack.c.l.b16 %v34
    %v67 = vunpack.c.l.b16 %v35
    %v68 = vunpack.c.l.b16 %v36
    %v69 = vunpack.c.l.b16 %v37
    %v70 = vunpack.c.l.b16 %v38
    %v71 = vunpack.c.l.b16 %v39
    %v72 = vunpack.c.l.b16 %v40
    %v73 = vunpack.c.l.b16 %v41
    %v74 = vunpack.c.l.b16 %v42
    %v75 = vunpack.c.l.b16 %v43
    %v76 = vunpack.c.l.b16 %v44
    %v77 = vunpack.c.l.b16 %v45
    %v78 = vpack.c.b16 %v63, %v62
    %v79 = vpack.c.b16 %v65, %v64
    %v80 = vpack.c.b16 %v67, %v66
    %v81 = vpack.c.b16 %v69, %v68
    %v82 = vpack.c.b16 %v71, %v70
    %v83 = vpack.c.b16 %v73, %v72
    %v84 = vpack.c.b16 %v75, %v74
    %v85 = vpack.c.b16 %v77, %v76
    %94 = vmatpush.bf16.msra.mxu0 %v85
    %95 = vmatpush.bf16.msra.mxu0 %v84
    %96 = vmatpush.bf16.msra.mxu0 %v83
    %97 = vmatpush.bf16.msra.mxu0 %v82
    %98 = vmatpush.bf16.msra.mxu0 %v81
    %99 = vmatpush.bf16.msra.mxu0 %v80
    %100 = vmatpush.bf16.msra.mxu0 %v79
    %101 = vmatpush.bf16.msra.mxu0 %v78
    %102 = vmatmul.bf16.gmra.mxu0 %v29
    %v103 = vpop.f32.mrf.mxu0
    %v104 = vadd.f32 0.0, %v103
    %v105 = vpop.f32.mrf.mxu0
    %106 = vdwg.mxu0
    %v107 = vrot.slane %v104, 4
    %v108 = vadd.f32 %v104, %v107
    %v109 = vrot.slane %v108, 2
    %v110 = vadd.f32 %v108, %v109
    %v111 = vrot.slane %v110, 1
    %v112 = vadd.f32 %v110, %v111
    %v113 = vmul.f32 %v104, %v104
    %v114 = vrot.slane %v113, 4
    %v115 = vadd.f32 %v113, %v114
    %v116 = vrot.slane %v115, 2
    %v117 = vadd.f32 %v115, %v116
    %v118 = vrot.slane %v117, 1
    %v119 = vadd.f32 %v117, %v118
    %v120 = vmul.f32 %v112, 0.125
    %v121 = vmul.f32 %v119, 0.125
    %v122 = vmul.f32 %v120, %v120
    %v123 = vsub.f32 %v121, %v122
    %v124 = vmax.f32 %v123, 0.0
    %v125 = vadd.f32 %v124, 1e-05
    %v126 = vrsqrt.pop %v125
    %v127 = vmul.f32 %v126, %v125
    %v128 = vmul.f32 %v127, %v126
    %v129 = vmul.f32 0.5, %v128
    %v130 = vsub.f32 1.5, %v129
    %v131 = vmul.f32 %v126, %v130
    %vm132 = vweird.f32 %v125
    %vm133 = vweird.f32 %v126
    %vm134 = vmor %vm132, %vm133
    %v135 = vsel %vm134, %v126, %v131
    %v136 = vld [vmem:[%s2] sm:$0x1]
    %v137 = vmul.f32 %v135, %v136
    %v138 = vld [vmem:[%s3] sm:$0x1]
    %v139 = vmul.f32 %v120, %v137
    %v140 = vsub.f32 %v138, %v139
    %v141 = vperm.slane %v137, 0
    %v142 = vmul.f32 %v104, %v141
    %v144 = vperm.slane %v140, 0
    %v146 = vadd.f32 %v142, %v144
    %v147 = vmax.f32 %v146, 0.0
    %v148 = vld [vmem:[#allocation2] sm:$0xff]
    %v149 = vpack.c.bf16 %v147, %v147
    %v150 = vld [vmem:[%s4] sm:$0xf]
    %v151 = vld [vmem:[%s4 + $0x4] sm:$0xf]
    %v152 = vld [vmem:[%s4 + $0x8] sm:$0xf]
    %v153 = vld [vmem:[%s4 + $0xc] sm:$0xf]
    %v154 = vld [vmem:[%s4 + $0x10] sm:$0xf]
    %v155 = vld [vmem:[%s4 + $0x14] sm:$0xf]
    %v156 = vld [vmem:[%s4 + $0x18] sm:$0xf]
    %v157 = vld [vmem:[%s4 + $0x1c] sm:$0xf]
    %v158 = vld [vmem:[%s4 + $0x20] sm:$0xf]
    %v159 = vld [vmem:[%s4 + $0x24] sm:$0xf]
    %v160 = vld [vmem:[%s4 + $0x28] sm:$0xf]
    %v161 = vld [vmem:[%s4 + $0x2c] sm:$0xf]
    %v162 = vld [vmem:[%s4 + $0x30] sm:$0xf]
    %v163 = vld [vmem:[%s4 + $0x34] sm:$0xf]
    %v164 = vld [vmem:[%s4 + $0x38] sm:$0xf]
    %v165 = vld [vmem:[%s4 + $0x3c] sm:$0xf]
    %v182 = vunpack.c.l.b16 %v150
    %v183 = vunpack.c.l.b16 %v151
    %v184 = vunpack.c.l.b16 %v152
    %v185 = vunpack.c.l.b16 %v153
    %v186 = vunpack.c.l.b16 %v154
    %v187 = vunpack.c.l.b16 %v155
    %v188 = vunpack.c.l.b16 %v156
    %v189 = vunpack.c.l.b16 %v157
    %v190 = vunpack.c.l.b16 %v158
    %v191 = vunpack.c.l.b16 %v159
    %v192 = vunpack.c.l.b16 %v160
    %v193 = vunpack.c.l.b16 %v161
    %v194 = vunpack.c.l.b16 %v162
    %v195 = vunpack.c.l.b16 %v163
    %v196 = vunpack.c.l.b16 %v164
    %v197 = vunpack.c.l.b16 %v165
    %v198 = vpack.c.b16 %v183, %v182
    %v199 = vpack.c.b16 %v185, %v184
    %v200 = vpack.c.b16 %v187, %v186
    %v201 = vpack.c.b16 %v189, %v188
    %v202 = vpack.c.b16 %v191, %v190
    %v203 = vpack.c.b16 %v193, %v192
    %v204 = vpack.c.b16 %v195, %v194
    %v205 = vpack.c.b16 %v197, %v196
    %214 = vmatpush.bf16.msra.mxu0 %v205
    %215 = vmatpush.bf16.msra.mxu0 %v204
    %216 = vmatpush.bf16.msra.mxu0 %v203
    %217 = vmatpush.bf16.msra.mxu0 %v202
    %218 = vmatpush.bf16.msra.mxu0 %v201
    %219 = vmatpush.bf16.msra.mxu0 %v200
    %220 = vmatpush.bf16.msra.mxu0 %v199
    %221 = vmatpush.bf16.msra.mxu0 %v198
    %222 = vmatmul.bf16.gmra.mxu0 %v149
    %v223 = vpop.f32.mrf.mxu0
    %v224 = vadd.f32 0.0, %v223
    %v225 = vpop.f32.mrf.mxu0
    %226 = vdwg.mxu0
    %v227 = vadd.f32 %v148, %v224
    %228 = vst [vmem:[#allocation2] sm:$0xff] %v227
    // Predicated region
    $region30: #{mlp_forward.1} parent=1 // pred_check
      %p229 = pneg %p24
    $region31: #{mlp_forward.1} parent=1 // pred_check_branch
      %231 = sbr.rel (%p229) target = $region33
    $region32: #{mlp_forward.1} parent=1 // pred_region
      %v232 = vld [vmem:[#allocation2] sm:$0xff]
      %v233 = vld [vmem:[%s5] sm:$0x1]
      %v235 = vperm.slane %v233, 0
      %v237 = vadd.f32 %v232, %v235
      %238 = vst [vmem:[#allocation3] sm:$0xff] %v237
    $region33: #{mlp_forward.1} parent=1 // pred_fallthru
      _
    // Predicated region
    $region34: #{mlp_forward.1} parent=1 // pred_check
      _
    $region35: #{mlp_forward.1} parent=1 // pred_check_branch
      %240 = sbr.rel (0) target = $region37
    $region36: #{mlp_forward.1} parent=1 // pred_region
      %242 = vsyncadd [#allocation4], 0
      %s244 = sshll.u32 [#allocation3], 4
      %s245 = int_to_ptr.vmem [resolvable:$true] %s244
      %s246 = sshll.u32 %s6, 4
      %s247 = int_to_ptr.hbm [resolvable:$true] %s246
      %249 = dma.vmem_to_hbm [thread:$0]  %s245, 128, %s247, [#allocation4]
    $region37: #{mlp_forward.1} parent=1 // pred_fallthru
      _
    // Predicated region
    $region38: #{mlp_forward.1} parent=1 // pred_check
      _
    $region39: #{mlp_forward.1} parent=1 // pred_check_branch
      %251 = sbr.rel (0) target = $region41
    $region40: #{mlp_forward.1} parent=1 // pred_region
      %253 = dma.done [#allocation4], 128
    $region41: #{mlp_forward.1} parent=1 // pred_fallthru
      _
    %254 = vsyncpa [#allocation4], 1

</llo_original>
